<compile_context>
chip_gen: v5e
topology: v5e:2x2
jax: 0.10.0
libtpu: 0.0.40
codegen_flags: <defaults>
</compile_context>

<pallas_src>
import functools
import math

import jax
import jax.numpy as jnp
from jax.experimental import pallas as pl
from jax.experimental.pallas import tpu as pltpu


def _round_up(a, m):
    return (a + m - 1) // m * m


def _make_protein_cnn_kernel(num_layers, s_real, mask_segments):
    """Build the fused kernel for a fixed number of Linear layers.

    Kernel args: x_ref, (w_ref, b_ref) * num_layers, o_ref, acc_ref
      x_ref : (TB, TS, F_in_p)   bf16 activation tile
      w_ref : (F_in_p, F_p)      bf16 (pre-transposed, zero padded)
      b_ref : (1, F_p)           f32
      o_ref : (TB, F_out_p)      f32 pooled output (resident across segment axis)
      acc_ref: (TB, F_out_p)     f32 VMEM accumulator
    """

    def kernel(*args):
        x_ref = args[0]
        o_ref, acc_ref = args[-2], args[-1]
        layer_refs = args[1:-2]

        j = pl.program_id(1)

        @pl.when(j == 0)
        def _init():
            acc_ref[...] = jnp.zeros_like(acc_ref)

        tb, ts, _ = x_ref.shape
        # Collapse (batch_tile, segment_tile) rows onto the sublane axis.
        h = x_ref[...].reshape(tb * ts, -1)  # bf16 rows

        for l in range(num_layers):
            w_ref = layer_refs[2 * l]
            b_ref = layer_refs[2 * l + 1]
            z = jnp.dot(h.astype(w_ref.dtype), w_ref[...],
                        preferred_element_type=jnp.float32)
            h = jnp.maximum(z + b_ref[...], 0.0)  # f32

        h3 = h.reshape(tb, ts, -1)
        if mask_segments:
            # Zero contribution of zero-padded segment rows (they would otherwise
            # contribute ReLU(bias)-derived values to the mean).
            seg = jax.lax.broadcasted_iota(jnp.int32, (tb, ts, 1), 1) + j * ts
            h3 = jnp.where(seg < s_real, h3, 0.0)

        acc_ref[...] += h3.sum(axis=1)

        @pl.when(j == pl.num_programs(1) - 1)
        def _finalize():
            o_ref[...] = (acc_ref[...] * (1.0 / s_real)).astype(o_ref.dtype)

    return kernel


def protein_cnn_forward(x, weights, biases, *, block_b=256, block_s=64):
    """Fused ProteinCNN forward.

    x        : (B, S, dim*window) f32/bf16 protein segment embeddings
    weights  : list of (in_l, out_l) arrays (nn.Linear weight, pre-transposed)
    biases   : list of (out_l,) arrays
    returns  : (B, 1, dim) f32   (== torch.mean(..., dim=1, keepdim=True))
    """
    B, S, F_in = x.shape
    num_layers = len(weights)
    F_out = weights[-1].shape[1]

    # Lane-dense (multiple-of-128) feature padding.
    F_in_p = _round_up(F_in, 128)
    F_out_p = _round_up(F_out, 128)

    # Batch / segment tiling (sublane-aligned).
    TB = min(block_b, _round_up(B, 8))
    TS = min(block_s, _round_up(S, 8))
    Bp = _round_up(B, TB)
    Sp = _round_up(S, TS)

    # Zero padding: padded feature columns stay exactly zero through the ReLU
    # chain; padded batch rows are sliced off; padded segment rows are masked
    # inside the kernel before pooling.
    xp = jnp.pad(x, ((0, Bp - B), (0, Sp - S), (0, F_in_p - F_in))).astype(jnp.bfloat16)

    wb_args, wb_specs = [], []
    for l, (w, b) in enumerate(zip(weights, biases)):
        fi, fo = w.shape
        fip = F_in_p
        fop = F_out_p if l == num_layers - 1 else F_in_p
        wp = jnp.pad(w, ((0, fip - fi), (0, fop - fo))).astype(jnp.bfloat16)
        bp = jnp.pad(b.reshape(1, -1), ((0, 0), (0, fop - fo))).astype(jnp.float32)
        wb_args += [wp, bp]
        # Constant index_map -> weights stay VMEM-resident across all tiles.
        wb_specs += [pl.BlockSpec((fip, fop), lambda i, j: (0, 0)),
                     pl.BlockSpec((1, fop), lambda i, j: (0, 0))]

    kernel = _make_protein_cnn_kernel(num_layers, S, mask_segments=(Sp != S))

    out = pl.pallas_call(
        kernel,
        out_shape=jax.ShapeDtypeStruct((Bp, F_out_p), jnp.float32),
        grid=(Bp // TB, Sp // TS),
        in_specs=[pl.BlockSpec((TB, TS, F_in_p), lambda i, j: (i, j, 0))] + wb_specs,
        out_specs=pl.BlockSpec((TB, F_out_p), lambda i, j: (i, 0)),
        scratch_shapes=[pltpu.VMEM((TB, F_out_p), jnp.float32)],
        compiler_params=pltpu.CompilerParams(
            dimension_semantics=("parallel", "arbitrary")),
    )(xp, *wb_args)

    # Drop padding and restore keepdim=True pooling shape: (B, 1, dim).
    return out[:B, :F_out][:, None, :]


def protein_cnn_reference(x, weights, biases):
    """Pure-JAX f32 reference of the same forward."""
    h = x
    for w, b in zip(weights, biases):
        h = jnp.maximum(h @ w + b, 0.0)
    return jnp.mean(h, axis=1, keepdims=True)


if __name__ == "__main__":
    # Small config consistent with the module: dim*window == 128 (lane-dense),
    # final dim = 32 (exercises output-feature padding), 2 layers (the default).
    dim, window, num_layers = 32, 4, 2
    batch, segments = 4, 16
    f_in = dim * window  # 128

    key = jax.random.PRNGKey(0)
    keys = jax.random.split(key, 1 + 2 * num_layers)
    x = jax.random.normal(keys[0], (batch, segments, f_in), jnp.float32)

    # nn.Linear init: U(-1/sqrt(fan_in), 1/sqrt(fan_in)); weights stored
    # pre-transposed as (in, out) so the kernel does a plain h @ W matmul.
    layer_sizes = [(f_in, f_in)] * (num_layers - 1) + [(f_in, dim)]
    weights, biases = [], []
    for l, (fi, fo) in enumerate(layer_sizes):
        bnd = 1.0 / math.sqrt(fi)
        weights.append(jax.random.uniform(keys[1 + 2 * l], (fi, fo), jnp.float32, -bnd, bnd))
        biases.append(jax.random.uniform(keys[2 + 2 * l], (fo,), jnp.float32, -bnd, bnd))

    # block_s=8 -> two segment tiles, exercising the cross-tile pooling accumulator.
    out = protein_cnn_forward(x, weights, biases, block_b=256, block_s=8)
    out = jax.block_until_ready(out)

    ref = protein_cnn_reference(x, weights, biases)
    assert out.shape == (batch, 1, dim), out.shape
    max_err = jnp.max(jnp.abs(out - ref))
    assert jnp.allclose(out, ref, atol=3e-2, rtol=3e-2), f"mismatch, max err {max_err}"

    print("KERNEL_OK")
</pallas_src>

<mosaic_0001>
module attributes {stable_mosaic.version = 11 : i64} {
  func.func @kernel(%arg0: i32, %arg1: i32, %arg2: memref<8x8x128xbf16, #tpu.memory_space<vmem>>, %arg3: memref<128x128xbf16, #tpu.memory_space<vmem>>, %arg4: memref<1x128xf32, #tpu.memory_space<vmem>>, %arg5: memref<128x128xbf16, #tpu.memory_space<vmem>>, %arg6: memref<1x128xf32, #tpu.memory_space<vmem>>, %arg7: memref<8x128xf32, #tpu.memory_space<vmem>>, %arg8: memref<8x128xf32, #tpu.memory_space<vmem>>) attributes {dimension_semantics = [#tpu.dimension_semantics<parallel>, #tpu.dimension_semantics<arbitrary>], iteration_bounds = array<i64: 1, 2>, scalar_prefetch = 0 : i64, scratch_operands = 1 : i64, tpu.core_type = #tpu.core_type<tc>, window_params = [{transform_indices = @transform_0, window_bounds = array<i64: 8, 8, 128>}, {pipeline_mode = #tpu.pipeline_mode<synchronous>, transform_indices = @transform_1, window_bounds = array<i64: 128, 128>}, {pipeline_mode = #tpu.pipeline_mode<synchronous>, transform_indices = @transform_2, window_bounds = array<i64: 1, 128>}, {pipeline_mode = #tpu.pipeline_mode<synchronous>, transform_indices = @transform_3, window_bounds = array<i64: 128, 128>}, {pipeline_mode = #tpu.pipeline_mode<synchronous>, transform_indices = @transform_4, window_bounds = array<i64: 1, 128>}, {transform_indices = @transform_5, window_bounds = array<i64: 8, 128>}]} {
    %c0_i32 = arith.constant 0 : i32
    %0 = arith.cmpi eq, %arg1, %c0_i32 : i32
    %1 = arith.extui %0 : i1 to i32
    %c0_i32_0 = arith.constant 0 : i32
    %2 = arith.cmpi ne, %1, %c0_i32_0 : i32
    scf.if %2 {
      %cst_20 = arith.constant 0.000000e+00 : f32
      %28 = vector.broadcast %cst_20 : f32 to vector<8x128xf32>
      %c0_21 = arith.constant 0 : index
      %c0_22 = arith.constant 0 : index
      %29 = vector.load %arg8[%c0_21, %c0_22] : memref<8x128xf32, #tpu.memory_space<vmem>>, vector<8x128xf32>
      tpu.vector_store %arg8[%c0_21, %c0_22], %28 {strides = array<i32>} : memref<8x128xf32, #tpu.memory_space<vmem>>, vector<8x128xf32>,
    } else {
    }
    %c0 = arith.constant 0 : index
    %c0_1 = arith.constant 0 : index
    %c0_2 = arith.constant 0 : index
    %3 = vector.load %arg2[%c0, %c0_1, %c0_2] : memref<8x8x128xbf16, #tpu.memory_space<vmem>>, vector<8x8x128xbf16>
    %4 = vector.shape_cast %3 : vector<8x8x128xbf16> to vector<64x128xbf16>
    %c0_3 = arith.constant 0 : index
    %c0_4 = arith.constant 0 : index
    %5 = vector.load %arg3[%c0_3, %c0_4] : memref<128x128xbf16, #tpu.memory_space<vmem>>, vector<128x128xbf16>
    %cst = arith.constant dense<0.000000e+00> : vector<64x128xf32>
    %6 = tpu.matmul %4, %5, %cst {dimension_numbers = #tpu.dot_dimension_numbers<[1], [0], [0], [1], [0, 0, 1, 1], [], []>} : vector<64x128xbf16>, vector<128x128xbf16>, vector<64x128xf32> -> vector<64x128xf32>
    %c0_5 = arith.constant 0 : index
    %c0_6 = arith.constant 0 : index
    %7 = vector.load %arg4[%c0_5, %c0_6] : memref<1x128xf32, #tpu.memory_space<vmem>>, vector<1x128xf32>
    %8 = vector.broadcast %7 : vector<1x128xf32> to vector<64x128xf32>
    %9 = arith.addf %6, %8 : vector<64x128xf32>
    %cst_7 = arith.constant 0.000000e+00 : f32
    %10 = vector.broadcast %cst_7 : f32 to vector<64x128xf32>
    %11 = arith.maximumf %9, %10 : vector<64x128xf32>
    %12 = arith.truncf %11 : vector<64x128xf32> to vector<64x128xbf16>
    %c0_8 = arith.constant 0 : index
    %c0_9 = arith.constant 0 : index
    %13 = vector.load %arg5[%c0_8, %c0_9] : memref<128x128xbf16, #tpu.memory_space<vmem>>, vector<128x128xbf16>
    %cst_10 = arith.constant dense<0.000000e+00> : vector<64x128xf32>
    %14 = tpu.matmul %12, %13, %cst_10 {dimension_numbers = #tpu.dot_dimension_numbers<[1], [0], [0], [1], [0, 0, 1, 1], [], []>} : vector<64x128xbf16>, vector<128x128xbf16>, vector<64x128xf32> -> vector<64x128xf32>
    %c0_11 = arith.constant 0 : index
    %c0_12 = arith.constant 0 : index
    %15 = vector.load %arg6[%c0_11, %c0_12] : memref<1x128xf32, #tpu.memory_space<vmem>>, vector<1x128xf32>
    %16 = vector.broadcast %15 : vector<1x128xf32> to vector<64x128xf32>
    %17 = arith.addf %14, %16 : vector<64x128xf32>
    %cst_13 = arith.constant 0.000000e+00 : f32
    %18 = vector.broadcast %cst_13 : f32 to vector<64x128xf32>
    %19 = arith.maximumf %17, %18 : vector<64x128xf32>
    %20 = vector.shape_cast %19 : vector<64x128xf32> to vector<8x8x128xf32>
    %c0_14 = arith.constant 0 : index
    %c0_15 = arith.constant 0 : index
    %21 = vector.load %arg8[%c0_14, %c0_15] : memref<8x128xf32, #tpu.memory_space<vmem>>, vector<8x128xf32>
    %cst_16 = arith.constant dense<0.000000e+00> : vector<8x128xf32>
    %22 = vector.multi_reduction <add>, %20, %cst_16 [1] : vector<8x8x128xf32> to vector<8x128xf32>
    %23 = arith.addf %21, %22 : vector<8x128xf32>
    %c0_17 = arith.constant 0 : index
    %c0_18 = arith.constant 0 : index
    %24 = vector.load %arg8[%c0_17, %c0_18] : memref<8x128xf32, #tpu.memory_space<vmem>>, vector<8x128xf32>
    tpu.vector_store %arg8[%c0_17, %c0_18], %23 {strides = array<i32>} : memref<8x128xf32, #tpu.memory_space<vmem>>, vector<8x128xf32>,
    %c1_i32 = arith.constant 1 : i32
    %25 = arith.cmpi eq, %arg1, %c1_i32 : i32
    %26 = arith.extui %25 : i1 to i32
    %c0_i32_19 = arith.constant 0 : i32
    %27 = arith.cmpi ne, %26, %c0_i32_19 : i32
    scf.if %27 {
      %c0_20 = arith.constant 0 : index
      %c0_21 = arith.constant 0 : index
      %28 = vector.load %arg8[%c0_20, %c0_21] : memref<8x128xf32, #tpu.memory_space<vmem>>, vector<8x128xf32>
      %cst_22 = arith.constant 6.250000e-02 : f32
      %29 = vector.broadcast %cst_22 : f32 to vector<8x128xf32>
      %30 = arith.mulf %28, %29 : vector<8x128xf32>
      %c0_23 = arith.constant 0 : index
      %c0_24 = arith.constant 0 : index
      %31 = vector.load %arg7[%c0_23, %c0_24] : memref<8x128xf32, #tpu.memory_space<vmem>>, vector<8x128xf32>
      tpu.vector_store %arg7[%c0_23, %c0_24], %30 {strides = array<i32>} : memref<8x128xf32, #tpu.memory_space<vmem>>, vector<8x128xf32>,
    } else {
    }
    return
  }
  func.func @transform_0(%arg0: i32, %arg1: i32) -> (i32, i32, i32) {
    %c0_i32 = arith.constant 0 : i32
    %c0_i32_0 = arith.constant 0 : i32
    return %arg0, %arg1, %c0_i32 : i32, i32, i32
  }
  func.func @transform_1(%arg0: i32, %arg1: i32) -> (i32, i32) {
    %c0_i32 = arith.constant 0 : i32
    %c0_i32_0 = arith.constant 0 : i32
    %c0_i32_1 = arith.constant 0 : i32
    return %c0_i32, %c0_i32_0 : i32, i32
  }
  func.func @transform_2(%arg0: i32, %arg1: i32) -> (i32, i32) {
    %c0_i32 = arith.constant 0 : i32
    %c0_i32_0 = arith.constant 0 : i32
    %c0_i32_1 = arith.constant 0 : i32
    return %c0_i32, %c0_i32_0 : i32, i32
  }
  func.func @transform_3(%arg0: i32, %arg1: i32) -> (i32, i32) {
    %c0_i32 = arith.constant 0 : i32
    %c0_i32_0 = arith.constant 0 : i32
    %c0_i32_1 = arith.constant 0 : i32
    return %c0_i32, %c0_i32_0 : i32, i32
  }
  func.func @transform_4(%arg0: i32, %arg1: i32) -> (i32, i32) {
    %c0_i32 = arith.constant 0 : i32
    %c0_i32_0 = arith.constant 0 : i32
    %c0_i32_1 = arith.constant 0 : i32
    return %c0_i32, %c0_i32_0 : i32, i32
  }
  func.func @transform_5(%arg0: i32, %arg1: i32) -> (i32, i32) {
    %c0_i32 = arith.constant 0 : i32
    %c0_i32_0 = arith.constant 0 : i32
    return %arg0, %c0_i32 : i32, i32
  }
}

</mosaic_0001>

<llo_original>
// kernel: tpu_custom_call.1
$region0: #{tpu_custom_call.1}
  #allocation0 [shape = 'u32[]', space=smem, size = 0x4, offset = 0x4, fixed_abs, tag = 'smem constant byte address 0x4 - core index']
  #allocation1 [shape = 'u32[72,128]{1,0:T(1,128)}', space=vmem, size = 0x9000, scoped, tag = 'internal scratch']
  #allocation2 [shape = 'f32[8,128]{1,0:T(8,128)}', space=vmem, size = 0x1000, scoped, tag = 'scratch operand']
  %s0 = inlined_call_operand.hbm [shape: bf16[8,16,128], index: 0, kind: input, shape index: {}]
  %s1 = inlined_call_operand.hbm [shape: bf16[128,128], index: 1, kind: input, shape index: {}]
  %s2 = inlined_call_operand.vmem [shape: f32[1,128], index: 2, kind: input, shape index: {}]
  %s3 = inlined_call_operand.hbm [shape: bf16[128,128], index: 3, kind: input, shape index: {}]
  %s4 = inlined_call_operand.vmem [shape: f32[1,128], index: 4, kind: input, shape index: {}]
  %s5 = inlined_call_operand.hbm [shape: f32[8,128], index: 5, kind: output, shape index: {}]
  %s6 = sld [smem:[#allocation0]]
  $region73: #{tpu_custom_call.1} parent=0
    _
  %s8 = ssub.s32 1, %s6
  %s9 = scalar_select 0, %s8, %s6
  $region1: #{tpu_custom_call.1} parent=0
    #allocation3 [shape = 'u8[32768]{0}', space=vmem, size = 0x8000, scoped, tag = 'input window, operand 0']
    #allocation4 [shape = 's32[2]{0}', space=sflag, size = 0x8, scoped, tag = 'scoped memory for tpu_custom_call.1']
    #allocation5 [shape = 's32[2]{0}', space=sflag, size = 0x8, scoped, tag = 'scoped memory for tpu_custom_call.1']
    #allocation6 [shape = 'u8[32768]{0}', space=vmem, size = 0x8000, scoped, tag = 'input window, operand 1, single buffered']
    #allocation7 [shape = 's32[1]{0}', space=sflag, size = 0x4, scoped, tag = 'scoped memory for tpu_custom_call.1']
    #allocation8 [shape = 'u8[32768]{0}', space=vmem, size = 0x8000, scoped, tag = 'input window, operand 3, single buffered']
    #allocation9 [shape = 'u8[4096]{0}', space=vmem, size = 0x1000, scoped, tag = 'output window, operand 0, single buffered']
    %10 = vsyncpa [#allocation4], 0
    %s11 = scalar_lea.sflag [#allocation4], 1
    %12 = vsyncpa %s11, 0
    %13 = vsyncpa [#allocation7], 0
    %14 = vsyncpa [#allocation5], 0
    loop: start=0, step=1, limit=4
    $region2: #{tpu_custom_call.1} parent=1 // loop_pre_header
      _
    $region3: #{tpu_custom_call.1} parent=1 // loop_header
      %s16 = sphi 0, %s20
      %p17 = scmp.ge.s32.totalorder %s16, 4
      %s23 = sphi 0, %s35
      %s24 = sphi 0, %s31
      %s25 = sphi 0, %s23
      %s26 = sphi 0, %s24
      %s27 = sphi 0, %s25
      %s28 = sphi 0, %s26
      %s40 = sphi 0, %s42
      %s43 = sphi 0, %s40
      %s44 = sphi 0, %s43
      %s60 = sphi 0, %s44
      %s64 = sphi 0, %s64
      %s66 = sphi 0, %s64
      %s67 = sphi 0, %s66
      %s81 = sphi 0, %s67
      %s85 = sphi 0, %s85
      %s87 = sphi 0, %s85
      %s88 = sphi 0, %s87
      %s102 = sphi 0, %s88
      %s106 = sphi 0, %s106
      %s108 = sphi 0, %s106
      %s109 = sphi 0, %s108
      %s123 = sphi 0, %s109
      %s127 = sphi 0, %s127
      %s129 = sphi 0, %s127
      %s130 = sphi 0, %s129
      %s144 = sphi 0, %s130
      %s150 = sphi 0, %s152
      %s153 = sphi 0, %s150
      %s154 = sphi 0, %s153
      %s170 = sphi 0, %s154
    $region4: #{tpu_custom_call.1} parent=1 // loop_header_branch
      %19 = sbr.rel (%p17) target = $region8
    $region5: #{tpu_custom_call.1} parent=1 // loop_body
      %s21 = ssub.s32 %s16, 1
      %s22 = ssub.s32 %s16, 2
      %s29 = sadd.s32 1, %s24
      %p30 = scmp.ge.s32.totalorder %s29, 2
      %s31 = scalar_select %p30, 0, %s29
      %s32 = sadd.s32 1, %s23
      %s33 = scalar_select %p30, %s32, %s23
      %p34 = scmp.ge.s32.totalorder %s33, 1
      %s35 = scalar_select %p34, 0, %s33
      %s36 = ssub.s32 %s23, %s35
      %s37 = ssub.s32 %s24, %s31
      %s38 = sor.u32 %s36, %s37
      %p39 = scmp.eq.s32.totalorder %s38, 0
      %s41 = sadd.s32 %s40, 1
      %s42 = scalar_select %p39, %s40, %s41
      %p45 = pneg %p39
      %p46 = scmp.eq.s32.totalorder %s16, 1
      %p47 = por %p45, %p46
      %p48 = scmp.ne.s32.totalorder %s40, %s43
      %p49 = scmp.eq.s32.totalorder %s16, 0
      %p50 = por %p48, %p49
      %p51 = scmp.ne.s32.totalorder %s40, %s43
      %p52 = scmp.eq.s32.totalorder %s21, 1
      %p53 = por %p51, %p52
      %p54 = scmp.ne.s32.totalorder %s43, %s44
      %p55 = scmp.eq.s32.totalorder %s21, 0
      %p56 = por %p54, %p55
      %p57 = scmp.ne.s32.totalorder %s43, %s44
      %p58 = scmp.eq.s32.totalorder %s22, 1
      %p59 = por %p57, %p58
      %p61 = scmp.ne.s32.totalorder %s44, %s60
      %p62 = scmp.eq.s32.totalorder %s22, 0
      %p63 = por %p61, %p62
      %s65 = sadd.s32 %s64, 1
      %p68 = scmp.eq.s32.totalorder %s16, 1
      %p69 = scmp.ne.s32.totalorder %s64, %s66
      %p70 = scmp.eq.s32.totalorder %s16, 0
      %p71 = por %p69, %p70
      %p72 = scmp.ne.s32.totalorder %s64, %s66
      %p73 = scmp.eq.s32.totalorder %s21, 1
      %p74 = por %p72, %p73
      %p75 = scmp.ne.s32.totalorder %s66, %s67
      %p76 = scmp.eq.s32.totalorder %s21, 0
      %p77 = por %p75, %p76
      %p78 = scmp.ne.s32.totalorder %s66, %s67
      %p79 = scmp.eq.s32.totalorder %s22, 1
      %p80 = por %p78, %p79
      %p82 = scmp.ne.s32.totalorder %s67, %s81
      %p83 = scmp.eq.s32.totalorder %s22, 0
      %p84 = por %p82, %p83
      %s86 = sadd.s32 %s85, 1
      %p89 = scmp.eq.s32.totalorder %s16, 1
      %p90 = scmp.ne.s32.totalorder %s85, %s87
      %p91 = scmp.eq.s32.totalorder %s16, 0
      %p92 = por %p90, %p91
      %p93 = scmp.ne.s32.totalorder %s85, %s87
      %p94 = scmp.eq.s32.totalorder %s21, 1
      %p95 = por %p93, %p94
      %p96 = scmp.ne.s32.totalorder %s87, %s88
      %p97 = scmp.eq.s32.totalorder %s21, 0
      %p98 = por %p96, %p97
      %p99 = scmp.ne.s32.totalorder %s87, %s88
      %p100 = scmp.eq.s32.totalorder %s22, 1
      %p101 = por %p99, %p100
      %p103 = scmp.ne.s32.totalorder %s88, %s102
      %p104 = scmp.eq.s32.totalorder %s22, 0
      %p105 = por %p103, %p104
      %s107 = sadd.s32 %s106, 1
      %p110 = scmp.eq.s32.totalorder %s16, 1
      %p111 = scmp.ne.s32.totalorder %s106, %s108
      %p112 = scmp.eq.s32.totalorder %s16, 0
      %p113 = por %p111, %p112
      %p114 = scmp.ne.s32.totalorder %s106, %s108
      %p115 = scmp.eq.s32.totalorder %s21, 1
      %p116 = por %p114, %p115
      %p117 = scmp.ne.s32.totalorder %s108, %s109
      %p118 = scmp.eq.s32.totalorder %s21, 0
      %p119 = por %p117, %p118
      %p120 = scmp.ne.s32.totalorder %s108, %s109
      %p121 = scmp.eq.s32.totalorder %s22, 1
      %p122 = por %p120, %p121
      %p124 = scmp.ne.s32.totalorder %s109, %s123
      %p125 = scmp.eq.s32.totalorder %s22, 0
      %p126 = por %p124, %p125
      %s128 = sadd.s32 %s127, 1
      %p131 = scmp.eq.s32.totalorder %s16, 1
      %p132 = scmp.ne.s32.totalorder %s127, %s129
      %p133 = scmp.eq.s32.totalorder %s16, 0
      %p134 = por %p132, %p133
      %p135 = scmp.ne.s32.totalorder %s127, %s129
      %p136 = scmp.eq.s32.totalorder %s21, 1
      %p137 = por %p135, %p136
      %p138 = scmp.ne.s32.totalorder %s129, %s130
      %p139 = scmp.eq.s32.totalorder %s21, 0
      %p140 = por %p138, %p139
      %p141 = scmp.ne.s32.totalorder %s129, %s130
      %p142 = scmp.eq.s32.totalorder %s22, 1
      %p143 = por %p141, %p142
      %p145 = scmp.ne.s32.totalorder %s130, %s144
      %p146 = scmp.eq.s32.totalorder %s22, 0
      %p147 = por %p145, %p146
      %s148 = ssub.s32 %s23, %s35
      %p149 = scmp.eq.s32.totalorder %s148, 0
      %s151 = sadd.s32 %s150, 1
      %s152 = scalar_select %p149, %s150, %s151
      %p155 = pneg %p149
      %p156 = scmp.eq.s32.totalorder %s16, 1
      %p157 = por %p155, %p156
      %p158 = scmp.ne.s32.totalorder %s150, %s153
      %p159 = scmp.eq.s32.totalorder %s16, 0
      %p160 = por %p158, %p159
      %p161 = scmp.ne.s32.totalorder %s150, %s153
      %p162 = scmp.eq.s32.totalorder %s21, 1
      %p163 = por %p161, %p162
      %p164 = scmp.ne.s32.totalorder %s153, %s154
      %p165 = scmp.eq.s32.totalorder %s21, 0
      %p166 = por %p164, %p165
      %p167 = scmp.ne.s32.totalorder %s153, %s154
      %p168 = scmp.eq.s32.totalorder %s22, 1
      %p169 = por %p167, %p168
      %p171 = scmp.ne.s32.totalorder %s154, %s170
      %p172 = scmp.eq.s32.totalorder %s22, 0
      %p173 = por %p171, %p172
      %p174 = scmp.le.s32.totalorder 1, %s16
      %p175 = scmp.lt.s32.totalorder %s16, 3
      %p176 = pnand %p174, %p175
      %p177 = pneg %p176
      // Predicated region
      $region9: #{tpu_custom_call.1} parent=5 // pred_check
        _
      $region10: #{tpu_custom_call.1} parent=5 // pred_check_branch
        %179 = sbr.rel (%p176) target = $region12
      $region11: #{tpu_custom_call.1} parent=5 // pred_region
        %s180 = ssub.s32 %s16, 1
        // Predicated region
        $region13: #{tpu_custom_call.1} parent=11 // pred_check
          %p181 = pneg %p77
        $region14: #{tpu_custom_call.1} parent=11 // pred_check_branch
          %183 = sbr.rel (%p181) target = $region16
        $region15: #{tpu_custom_call.1} parent=11 // pred_region
          %185 = vsyncadd [#allocation7], 0
          %s186 = sshll.u32 %s1, 4
          %s187 = int_to_ptr.hbm [resolvable:$true] %s186
          %s188 = sshll.u32 [#allocation6], 4
          %s189 = int_to_ptr.vmem [resolvable:$true] %s188
          %194 = dma.hbm_to_vmem [thread:$0]  %s187, 1024, %s189, [#allocation7], 64, 64, 4
        $region16: #{tpu_custom_call.1} parent=11 // pred_fallthru
          _
        // Predicated region
        $region17: #{tpu_custom_call.1} parent=11 // pred_check
          %p195 = pneg %p98
        $region18: #{tpu_custom_call.1} parent=11 // pred_check_branch
          %197 = sbr.rel (%p195) target = $region20
        $region19: #{tpu_custom_call.1} parent=11 // pred_region
          _
        $region20: #{tpu_custom_call.1} parent=11 // pred_fallthru
          _
        // Predicated region
        $region21: #{tpu_custom_call.1} parent=11 // pred_check
          %p198 = pneg %p119
        $region22: #{tpu_custom_call.1} parent=11 // pred_check_branch
          %200 = sbr.rel (%p198) target = $region24
        $region23: #{tpu_custom_call.1} parent=11 // pred_region
          %202 = vsyncadd [#allocation7], 0
          %s203 = sshll.u32 %s3, 4
          %s204 = int_to_ptr.hbm [resolvable:$true] %s203
          %s205 = sshll.u32 [#allocation8], 4
          %s206 = int_to_ptr.vmem [resolvable:$true] %s205
          %211 = dma.hbm_to_vmem [thread:$0]  %s204, 1024, %s206, [#allocation7], 64, 64, 4
        $region24: #{tpu_custom_call.1} parent=11 // pred_fallthru
          _
        // Predicated region
        $region25: #{tpu_custom_call.1} parent=11 // pred_check
          %p212 = pneg %p140
        $region26: #{tpu_custom_call.1} parent=11 // pred_check_branch
          %214 = sbr.rel (%p212) target = $region28
        $region27: #{tpu_custom_call.1} parent=11 // pred_region
          _
        $region28: #{tpu_custom_call.1} parent=11 // pred_fallthru
          _
      $region12: #{tpu_custom_call.1} parent=5 // pred_fallthru
        _
      %p215 = scmp.lt.s32.totalorder %s16, 2
      // Predicated region
      $region29: #{tpu_custom_call.1} parent=5 // pred_check
        %p216 = pneg %p215
      $region30: #{tpu_custom_call.1} parent=5 // pred_check_branch
        %218 = sbr.rel (%p216) target = $region32
      $region31: #{tpu_custom_call.1} parent=5 // pred_region
        // Predicated region
        $region33: #{tpu_custom_call.1} parent=31 // pred_check
          %p219 = pneg %p50
        $region34: #{tpu_custom_call.1} parent=31 // pred_check_branch
          %221 = sbr.rel (%p219) target = $region36
        $region35: #{tpu_custom_call.1} parent=31 // pred_region
          %s222 = sand.u32 %s40, 1
          %s223 = scalar_lea.sflag [#allocation4], %s222
          %s224 = sand.u32 %s40, 1
          %s225 = smul.addr %s224, 32
          %s226 = scalar_lea.vmem [#allocation3], %s225
          %s227 = smul.u32 8, %s23
          %229 = vsyncadd %s223, 0
          %s230 = smul.addr %s227, 2
          %s231 = sadd.s32 %s24, %s230
          %s232 = smul.addr %s231, 4
          %s233 = scalar_lea.hbm %s0, %s232
          %s234 = sshll.u32 %s233, 4
          %s235 = int_to_ptr.hbm [resolvable:$true] %s234
          %s236 = sshll.u32 %s226, 4
          %s237 = int_to_ptr.vmem [resolvable:$true] %s236
          %242 = dma.hbm_to_vmem [thread:$0]  %s235, 512, %s237, %s223, 128, 64, 4
        $region36: #{tpu_custom_call.1} parent=31 // pred_fallthru
          _
      $region32: #{tpu_custom_call.1} parent=5 // pred_fallthru
        _
      %p243 = scmp.le.s32.totalorder 1, %s16
      %p244 = scmp.lt.s32.totalorder %s16, 3
      %p245 = pnand %p243, %p244
      %p246 = pneg %p245
      // Predicated region
      $region37: #{tpu_custom_call.1} parent=5 // pred_check
        _
      $region38: #{tpu_custom_call.1} parent=5 // pred_check_branch
        %248 = sbr.rel (%p245) target = $region40
      $region39: #{tpu_custom_call.1} parent=5 // pred_region
        %s249 = ssub.s32 %s16, 1
        %s250 = sand.u32 %s43, 1
        %s251 = scalar_lea.sflag [#allocation4], %s250
        %s252 = sand.u32 %s43, 1
        %s253 = smul.addr %s252, 32
        %s254 = scalar_lea.vmem [#allocation3], %s253
        // Predicated region
        $region41: #{tpu_custom_call.1} parent=39 // pred_check
          %p255 = pneg %p56
        $region42: #{tpu_custom_call.1} parent=39 // pred_check_branch
          %257 = sbr.rel (%p255) target = $region44
        $region43: #{tpu_custom_call.1} parent=39 // pred_region
          %259 = dma.done %s251, 512
        $region44: #{tpu_custom_call.1} parent=39 // pred_fallthru
          _
        // Predicated region
        $region45: #{tpu_custom_call.1} parent=39 // pred_check
          %p260 = pneg %p77
        $region46: #{tpu_custom_call.1} parent=39 // pred_check_branch
          %262 = sbr.rel (%p260) target = $region48
        $region47: #{tpu_custom_call.1} parent=39 // pred_region
          %264 = dma.done [#allocation7], 1024
        $region48: #{tpu_custom_call.1} parent=39 // pred_fallthru
          _
        // Predicated region
        $region49: #{tpu_custom_call.1} parent=39 // pred_check
          %p265 = pneg %p119
        $region50: #{tpu_custom_call.1} parent=39 // pred_check_branch
          %267 = sbr.rel (%p265) target = $region52
        $region51: #{tpu_custom_call.1} parent=39 // pred_region
          %269 = dma.done [#allocation7], 1024
        $region52: #{tpu_custom_call.1} parent=39 // pred_fallthru
          _
        %s270 = sand.u32 %s43, 1
        %s271 = scalar_lea.sflag [#allocation4], %s270
        %s272 = sand.u32 %s43, 1
        %s273 = smul.addr %s272, 32
        %s274 = scalar_lea.vmem [#allocation3], %s273
        %p275 = pneg %p56
        %p276 = pneg %p53
        %p277 = pneg %p77
        %p278 = pneg %p74
        %p279 = pneg %p98
        %p280 = pneg %p95
        %p281 = pneg %p119
        %p282 = pneg %p116
        %p283 = pneg %p140
        %p284 = pneg %p137
        %p285 = pneg %p166
        %p286 = pneg %p163
        %s287 = smul.u32 8, %s25
        %p288 = scmp.eq.s32.totalorder %s26, 0
        // Predicated region
        $region53: #{tpu_custom_call.1} parent=39 // pred_check
          %p289 = pneg %p288
        $region54: #{tpu_custom_call.1} parent=39 // pred_check_branch
          %291 = sbr.rel (%p289) target = $region56
        $region55: #{tpu_custom_call.1} parent=39 // pred_region
          %292 = vst [vmem:[#allocation2] sm:$0xff] 0.0
        $region56: #{tpu_custom_call.1} parent=39 // pred_fallthru
          _
        %v293 = vld [vmem:[%s254] sm:$0xf]
        %v294 = vld [vmem:[%s254 + $0x4] sm:$0xf]
        %v295 = vld [vmem:[%s254 + $0x8] sm:$0xf]
        %v296 = vld [vmem:[%s254 + $0xc] sm:$0xf]
        %v297 = vld [vmem:[%s254 + $0x10] sm:$0xf]
        %v298 = vld [vmem:[%s254 + $0x14] sm:$0xf]
        %v299 = vld [vmem:[%s254 + $0x18] sm:$0xf]
        %v300 = vld [vmem:[%s254 + $0x1c] sm:$0xf]
        %v301 = vld [vmem:[#allocation6] sm:$0xf]
        %v302 = vld [vmem:[#allocation6 + $0x4] sm:$0xf]
        %v303 = vld [vmem:[#allocation6 + $0x8] sm:$0xf]
        %v304 = vld [vmem:[#allocation6 + $0xc] sm:$0xf]
        %v305 = vld [vmem:[#allocation6 + $0x10] sm:$0xf]
        %v306 = vld [vmem:[#allocation6 + $0x14] sm:$0xf]
        %v307 = vld [vmem:[#allocation6 + $0x18] sm:$0xf]
        %v308 = vld [vmem:[#allocation6 + $0x1c] sm:$0xf]
        %v309 = vld [vmem:[#allocation6 + $0x20] sm:$0xf]
        %v310 = vld [vmem:[#allocation6 + $0x24] sm:$0xf]
        %v311 = vld [vmem:[#allocation6 + $0x28] sm:$0xf]
        %v312 = vld [vmem:[#allocation6 + $0x2c] sm:$0xf]
        %v313 = vld [vmem:[#allocation6 + $0x30] sm:$0xf]
        %v314 = vld [vmem:[#allocation6 + $0x34] sm:$0xf]
        %v315 = vld [vmem:[#allocation6 + $0x38] sm:$0xf]
        %v316 = vld [vmem:[#allocation6 + $0x3c] sm:$0xf]
        %v317 = vld [vmem:[%s2] sm:$0x1]
        %v319 = vperm.slane %v317, 0
        %v329 = vunpack.c.l.b16 %v293
        %v330 = vunpack.c.l.b16 %v294
        %v331 = vunpack.c.l.b16 %v295
        %v332 = vunpack.c.l.b16 %v296
        %v333 = vunpack.c.l.b16 %v297
        %v334 = vunpack.c.l.b16 %v298
        %v335 = vunpack.c.l.b16 %v299
        %v336 = vunpack.c.l.b16 %v300
        %v337 = vpack.c.b16 %v330, %v329
        %v338 = vpack.c.b16 %v332, %v331
        %v339 = vpack.c.b16 %v334, %v333
        %v340 = vpack.c.b16 %v336, %v335
        %v361 = vunpack.c.l.b16 %v301
        %v362 = vunpack.c.l.b16 %v302
        %v363 = vunpack.c.l.b16 %v303
        %v364 = vunpack.c.l.b16 %v304
        %v365 = vunpack.c.l.b16 %v305
        %v366 = vunpack.c.l.b16 %v306
        %v367 = vunpack.c.l.b16 %v307
        %v368 = vunpack.c.l.b16 %v308
        %v369 = vunpack.c.l.b16 %v309
        %v370 = vunpack.c.l.b16 %v310
        %v371 = vunpack.c.l.b16 %v311
        %v372 = vunpack.c.l.b16 %v312
        %v373 = vunpack.c.l.b16 %v313
        %v374 = vunpack.c.l.b16 %v314
        %v375 = vunpack.c.l.b16 %v315
        %v376 = vunpack.c.l.b16 %v316
        %v377 = vpack.c.b16 %v362, %v361
        %v378 = vpack.c.b16 %v364, %v363
        %v379 = vpack.c.b16 %v366, %v365
        %v380 = vpack.c.b16 %v368, %v367
        %v381 = vpack.c.b16 %v370, %v369
        %v382 = vpack.c.b16 %v372, %v371
        %v383 = vpack.c.b16 %v374, %v373
        %v384 = vpack.c.b16 %v376, %v375
        %393 = vmatpush.bf16.msra.mxu0 %v384
        %394 = vmatpush.bf16.msra.mxu0 %v383
        %395 = vmatpush.bf16.msra.mxu0 %v382
        %396 = vmatpush.bf16.msra.mxu0 %v381
        %397 = vmatpush.bf16.msra.mxu0 %v380
        %398 = vmatpush.bf16.msra.mxu0 %v379
        %399 = vmatpush.bf16.msra.mxu0 %v378
        %400 = vmatpush.bf16.msra.mxu0 %v377
        %401 = vmatmul.bf16.gmra.mxu0 %v337
        %v402 = vpop.f32.mrf.mxu0
        %v403 = vadd.f32 %v319, %v402
        %v404 = vpop.f32.mrf.mxu0
        %v405 = vadd.f32 %v319, %v404
        %406 = vmatmul.bf16.gmra.mxu0 %v338
        %v407 = vpop.f32.mrf.mxu0
        %v408 = vadd.f32 %v319, %v407
        %v409 = vpop.f32.mrf.mxu0
        %v410 = vadd.f32 %v319, %v409
        %411 = vmatmul.bf16.gmra.mxu0 %v339
        %v412 = vpop.f32.mrf.mxu0
        %v413 = vadd.f32 %v319, %v412
        %v414 = vpop.f32.mrf.mxu0
        %v415 = vadd.f32 %v319, %v414
        %416 = vmatmul.bf16.gmra.mxu0 %v340
        %v417 = vpop.f32.mrf.mxu0
        %v418 = vadd.f32 %v319, %v417
        %v419 = vpop.f32.mrf.mxu0
        %v420 = vadd.f32 %v319, %v419
        %421 = vdwg.mxu0
        %v422 = vmax.f32 %v403, 0.0
        %v423 = vmax.f32 %v405, 0.0
        %v424 = vmax.f32 %v408, 0.0
        %v425 = vmax.f32 %v410, 0.0
        %v426 = vmax.f32 %v413, 0.0
        %v427 = vmax.f32 %v415, 0.0
        %v428 = vmax.f32 %v418, 0.0
        %v429 = vmax.f32 %v420, 0.0
        %v430 = vpack.c.bf16 %v423, %v422
        %v431 = vpack.c.bf16 %v425, %v424
        %v432 = vpack.c.bf16 %v427, %v426
        %v433 = vpack.c.bf16 %v429, %v428
        %v434 = vld [vmem:[#allocation8] sm:$0xf]
        %v435 = vld [vmem:[#allocation8 + $0x4] sm:$0xf]
        %v436 = vld [vmem:[#allocation8 + $0x8] sm:$0xf]
        %v437 = vld [vmem:[#allocation8 + $0xc] sm:$0xf]
        %v438 = vld [vmem:[#allocation8 + $0x10] sm:$0xf]
        %v439 = vld [vmem:[#allocation8 + $0x14] sm:$0xf]
        %v440 = vld [vmem:[#allocation8 + $0x18] sm:$0xf]
        %v441 = vld [vmem:[#allocation8 + $0x1c] sm:$0xf]
        %v442 = vld [vmem:[#allocation8 + $0x20] sm:$0xf]
        %v443 = vld [vmem:[#allocation8 + $0x24] sm:$0xf]
        %v444 = vld [vmem:[#allocation8 + $0x28] sm:$0xf]
        %v445 = vld [vmem:[#allocation8 + $0x2c] sm:$0xf]
        %v446 = vld [vmem:[#allocation8 + $0x30] sm:$0xf]
        %v447 = vld [vmem:[#allocation8 + $0x34] sm:$0xf]
        %v448 = vld [vmem:[#allocation8 + $0x38] sm:$0xf]
        %v449 = vld [vmem:[#allocation8 + $0x3c] sm:$0xf]
        %v450 = vld [vmem:[%s4] sm:$0x1]
        %v452 = vperm.slane %v450, 0
        %v470 = vunpack.c.l.b16 %v434
        %v471 = vunpack.c.l.b16 %v435
        %v472 = vunpack.c.l.b16 %v436
        %v473 = vunpack.c.l.b16 %v437
        %v474 = vunpack.c.l.b16 %v438
        %v475 = vunpack.c.l.b16 %v439
        %v476 = vunpack.c.l.b16 %v440
        %v477 = vunpack.c.l.b16 %v441
        %v478 = vunpack.c.l.b16 %v442
        %v479 = vunpack.c.l.b16 %v443
        %v480 = vunpack.c.l.b16 %v444
        %v481 = vunpack.c.l.b16 %v445
        %v482 = vunpack.c.l.b16 %v446
        %v483 = vunpack.c.l.b16 %v447
        %v484 = vunpack.c.l.b16 %v448
        %v485 = vunpack.c.l.b16 %v449
        %v486 = vpack.c.b16 %v471, %v470
        %v487 = vpack.c.b16 %v473, %v472
        %v488 = vpack.c.b16 %v475, %v474
        %v489 = vpack.c.b16 %v477, %v476
        %v490 = vpack.c.b16 %v479, %v478
        %v491 = vpack.c.b16 %v481, %v480
        %v492 = vpack.c.b16 %v483, %v482
        %v493 = vpack.c.b16 %v485, %v484
        %502 = vmatpush.bf16.msra.mxu0 %v493
        %503 = vmatpush.bf16.msra.mxu0 %v492
        %504 = vmatpush.bf16.msra.mxu0 %v491
        %505 = vmatpush.bf16.msra.mxu0 %v490
        %506 = vmatpush.bf16.msra.mxu0 %v489
        %507 = vmatpush.bf16.msra.mxu0 %v488
        %508 = vmatpush.bf16.msra.mxu0 %v487
        %509 = vmatpush.bf16.msra.mxu0 %v486
        %510 = vmatmul.bf16.gmra.mxu0 %v430
        %v511 = vpop.f32.mrf.mxu0
        %v512 = vadd.f32 %v452, %v511
        %v513 = vpop.f32.mrf.mxu0
        %v514 = vadd.f32 %v452, %v513
        %515 = vmatmul.bf16.gmra.mxu0 %v431
        %v516 = vpop.f32.mrf.mxu0
        %v517 = vadd.f32 %v452, %v516
        %v518 = vpop.f32.mrf.mxu0
        %v519 = vadd.f32 %v452, %v518
        %520 = vmatmul.bf16.gmra.mxu0 %v432
        %v521 = vpop.f32.mrf.mxu0
        %v522 = vadd.f32 %v452, %v521
        %v523 = vpop.f32.mrf.mxu0
        %v524 = vadd.f32 %v452, %v523
        %525 = vmatmul.bf16.gmra.mxu0 %v433
        %v526 = vpop.f32.mrf.mxu0
        %v527 = vadd.f32 %v452, %v526
        %v528 = vpop.f32.mrf.mxu0
        %v529 = vadd.f32 %v452, %v528
        %530 = vdwg.mxu0
        %v531 = vmax.f32 %v512, 0.0
        %v532 = vmax.f32 %v514, 0.0
        %v533 = vmax.f32 %v517, 0.0
        %v534 = vmax.f32 %v519, 0.0
        %v535 = vmax.f32 %v522, 0.0
        %v536 = vmax.f32 %v524, 0.0
        %v537 = vmax.f32 %v527, 0.0
        %v538 = vmax.f32 %v529, 0.0
        %v539 = vld [vmem:[#allocation2] sm:$0xff]
        %v540 = vrot.slane %v531, 4
        %v541 = vadd.f32 %v531, %v540
        %v542 = vrot.slane %v541, 2
        %v543 = vadd.f32 %v541, %v542
        %v544 = vrot.slane %v543, 1
        %v545 = vadd.f32 %v543, %v544
        %v546 = vrot.slane %v532, 4
        %v547 = vadd.f32 %v532, %v546
        %v548 = vrot.slane %v547, 2
        %v549 = vadd.f32 %v547, %v548
        %v550 = vrot.slane %v549, 1
        %v551 = vadd.f32 %v549, %v550
        %v552 = vrot.slane %v533, 4
        %v553 = vadd.f32 %v533, %v552
        %v554 = vrot.slane %v553, 2
        %v555 = vadd.f32 %v553, %v554
        %v556 = vrot.slane %v555, 1
        %v557 = vadd.f32 %v555, %v556
        %v558 = vrot.slane %v534, 4
        %v559 = vadd.f32 %v534, %v558
        %v560 = vrot.slane %v559, 2
        %v561 = vadd.f32 %v559, %v560
        %v562 = vrot.slane %v561, 1
        %v563 = vadd.f32 %v561, %v562
        %v564 = vrot.slane %v535, 4
        %v565 = vadd.f32 %v535, %v564
        %v566 = vrot.slane %v565, 2
        %v567 = vadd.f32 %v565, %v566
        %v568 = vrot.slane %v567, 1
        %v569 = vadd.f32 %v567, %v568
        %v570 = vrot.slane %v536, 4
        %v571 = vadd.f32 %v536, %v570
        %v572 = vrot.slane %v571, 2
        %v573 = vadd.f32 %v571, %v572
        %v574 = vrot.slane %v573, 1
        %v575 = vadd.f32 %v573, %v574
        %v576 = vrot.slane %v537, 4
        %v577 = vadd.f32 %v537, %v576
        %v578 = vrot.slane %v577, 2
        %v579 = vadd.f32 %v577, %v578
        %v580 = vrot.slane %v579, 1
        %v581 = vadd.f32 %v579, %v580
        %v582 = vrot.slane %v538, 4
        %v583 = vadd.f32 %v538, %v582
        %v584 = vrot.slane %v583, 2
        %v585 = vadd.f32 %v583, %v584
        %v586 = vrot.slane %v585, 1
        %v587 = vadd.f32 %v585, %v586
        %vm596 = vcmask 1041409
        %v597 = vsel %vm596, %v551, %v545
        %vm598 = vcmask 1042434
        %v599 = vsel %vm598, %v557, %v597
        %vm600 = vcmask 1043459
        %v601 = vsel %vm600, %v563, %v599
        %vm602 = vcmask 1044484
        %v603 = vsel %vm602, %v569, %v601
        %vm604 = vcmask 1045509
        %v605 = vsel %vm604, %v575, %v603
        %vm606 = vcmask 1046534
        %v607 = vsel %vm606, %v581, %v605
        %vm608 = vcmask 1047559
        %v609 = vsel %vm608, %v587, %v607
        %v611 = vadd.f32 %v539, %v609
        %612 = vst [vmem:[#allocation2] sm:$0xff] %v611
        %p613 = scmp.eq.s32.totalorder %s26, 1
        // Predicated region
        $region57: #{tpu_custom_call.1} parent=39 // pred_check
          %p614 = pneg %p613
        $region58: #{tpu_custom_call.1} parent=39 // pred_check_branch
          %616 = sbr.rel (%p614) target = $region60
        $region59: #{tpu_custom_call.1} parent=39 // pred_region
          %v617 = vld [vmem:[#allocation2] sm:$0xff]
          %v618 = vmul.f32 %v617, 0.0625
          %619 = vst [vmem:[#allocation9] sm:$0xff] %v618
        $region60: #{tpu_custom_call.1} parent=39 // pred_fallthru
          _
        // Predicated region
        $region61: #{tpu_custom_call.1} parent=39 // pred_check
          %p620 = pneg %p163
        $region62: #{tpu_custom_call.1} parent=39 // pred_check_branch
          %622 = sbr.rel (%p620) target = $region64
        $region63: #{tpu_custom_call.1} parent=39 // pred_region
          %624 = vsyncadd [#allocation5], 0
          %s625 = smul.addr %s25, 8
          %s626 = scalar_lea.hbm %s5, %s625
          %s628 = sshll.u32 [#allocation9], 4
          %s629 = int_to_ptr.vmem [resolvable:$true] %s628
          %s630 = sshll.u32 %s626, 4
          %s631 = int_to_ptr.hbm [resolvable:$true] %s630
          %633 = dma.vmem_to_hbm [thread:$0]  %s629, 128, %s631, [#allocation5]
        $region64: #{tpu_custom_call.1} parent=39 // pred_fallthru
          _
        // Predicated region
        $region65: #{tpu_custom_call.1} parent=39 // pred_check
          %p634 = pneg %p163
        $region66: #{tpu_custom_call.1} parent=39 // pred_check_branch
          %636 = sbr.rel (%p634) target = $region68
        $region67: #{tpu_custom_call.1} parent=39 // pred_region
          %638 = dma.done [#allocation5], 128
        $region68: #{tpu_custom_call.1} parent=39 // pred_fallthru
          _
      $region40: #{tpu_custom_call.1} parent=5 // pred_fallthru
        _
      %p639 = scmp.le.s32.totalorder 2, %s16
      // Predicated region
      $region69: #{tpu_custom_call.1} parent=5 // pred_check
        %p640 = pneg %p639
      $region70: #{tpu_custom_call.1} parent=5 // pred_check_branch
        %642 = sbr.rel (%p640) target = $region72
      $region71: #{tpu_custom_call.1} parent=5 // pred_region
        %s643 = ssub.s32 %s16, 2
      $region72: #{tpu_custom_call.1} parent=5 // pred_fallthru
        _
    $region6: #{tpu_custom_call.1} parent=1 // loop_footer
      %s20 = sadd.s32 1, %s16
    $region7: #{tpu_custom_call.1} parent=1 // loop_footer_branch
      %15 = sbr.rel target = $region3
    $region8: #{tpu_custom_call.1} parent=1 // loop_exit
      _
    %644 = vsyncpa [#allocation4], 1
    %s645 = scalar_lea.sflag [#allocation4], 1
    %646 = vsyncpa %s645, 1
    %647 = vsyncpa [#allocation7], 1
    %648 = vsyncpa [#allocation5], 1
    %s649 = scalar_lea.sflag [#allocation5], 1
    %650 = vsyncpa %s649, 1

</llo_original>
